<compile_context>
chip_gen: v7x
topology: tpu7x:2x2x1
jax: 0.10.0
libtpu: 0.0.40
codegen_flags: <defaults>
</compile_context>

<pallas_src>
import functools

import jax
import jax.numpy as jnp
from jax.experimental import pallas as pl
from jax.experimental.pallas import tpu as pltpu


def _round_up(x: int, m: int) -> int:
    return (x + m - 1) // m * m


def _default_n_parallel() -> int:
    """One 'parallel' grid slot per TensorCore on the local device."""
    try:
        kind = jax.devices()[0].device_kind.lower()
    except Exception:  # pragma: no cover - be conservative off-TPU
        return 1
    # v5e / v6e have 1 TC per chip; v4 / v5p (megacore) and v7x have 2.
    if any(tag in kind for tag in ("v4", "v5p", "v7", "7x")):
        return 2
    return 1


def _make_focal_kernel(alpha, gamma, num_classes, sub, lane, n_inner, n_valid,
                       approx):
    eps = 1e-6
    block = sub * lane  # samples per grid step

    def focal_loss_kernel(x_ref, t_ref, out_ref):
        o = pl.program_id(0)      # parallel (per-TensorCore) axis
        i = pl.program_id(1)      # sequential accumulation axis

        # Zero this core's resident accumulator block on its first inner step.
        @pl.when(i == 0)
        def _init():
            out_ref[...] = jnp.zeros_like(out_ref)

        x = x_ref[...].astype(jnp.float32)   # (C, SUB, LANE), math in f32
        tgt = t_ref[...]                     # (SUB, LANE) int32

        # Per-class slabs are full (SUB, LANE) vregs -> dense VPU/EUP work.
        # NOTE: fully unrolled over classes; fine for C=4, revisit for C >~ 32.
        rows = [x[c] for c in range(num_classes)]

        m = rows[0]
        for r in rows[1:]:
            m = jnp.maximum(m, r)

        sumexp = None
        tgt_logit = jnp.zeros_like(m)
        tgt_exp = jnp.zeros_like(m)
        for c, r in enumerate(rows):
            e = jnp.exp(r - m)
            sumexp = e if sumexp is None else sumexp + e
            sel = tgt == c
            tgt_logit = jnp.where(sel, r, tgt_logit)
            tgt_exp = jnp.where(sel, e, tgt_exp)
        # NOTE: out-of-range targets silently give tgt_logit == 0 (ce == lse);
        # PyTorch's F.cross_entropy would raise instead.

        lse = m + jnp.log(sumexp)
        ce = lse - tgt_logit                              # per-sample CE

        # pt = softmax(logits)[target]; reuse exp(logits - m), approx recip.
        pt = tgt_exp * pl.reciprocal(sumexp, approx=approx)
        # Clamp: exact u >= eps always; the clamp only undoes approx-recip /
        # rounding error that could make pt marginally exceed 1 (sqrt(neg)!).
        u = jnp.maximum((1.0 + eps) - pt, eps)
        if gamma == 2.5:
            w = u * u * jnp.sqrt(u)                       # u**2.5, 1 EUP op
        else:
            w = u ** gamma
        focal = alpha * w * ce                            # (SUB, LANE)

        block_start = (o * n_inner + i) * block

        # Only blocks that actually contain batch padding pay for the mask.
        @pl.when(block_start + block <= n_valid)
        def _accumulate_full():
            out_ref[...] += focal

        @pl.when(block_start + block > n_valid)
        def _accumulate_masked():
            r_io = jax.lax.broadcasted_iota(jnp.int32, (sub, lane), 0)
            c_io = jax.lax.broadcasted_iota(jnp.int32, (sub, lane), 1)
            sample = block_start + r_io * lane + c_io
            out_ref[...] += jnp.where(sample < n_valid, focal, 0.0)

    return focal_loss_kernel


def focal_loss_packed(x_cml, t_ml, n_valid, *, alpha=0.25, gamma=2.5,
                      n_parallel=1, approx=True, reduction="mean"):
    """Focal loss on pre-packed inputs (zero wrapper relayout).

    x_cml: (C, S, LANE) class-major logits, x_cml[c, r, j] = logits[r*LANE+j, c]
           (dense: S multiple of the sublane tile, LANE multiple of 128).
    t_ml:  (S, LANE) int32 targets with the same (r, j) -> sample mapping.
    n_valid: number of real (unpadded) samples; trailing samples are padding.
    """
    c, s, lane = x_cml.shape
    sub = 32 // jnp.dtype(x_cml.dtype).itemsize   # 8 for f32, 16 for bf16
    assert lane % 128 == 0
    assert s % (sub * n_parallel) == 0
    assert t_ml.shape == (s, lane)
    n_inner = s // (sub * n_parallel)

    partials = pl.pallas_call(
        _make_focal_kernel(alpha, gamma, c, sub, lane, n_inner, n_valid, approx),
        out_shape=jax.ShapeDtypeStruct((n_parallel * sub, lane), jnp.float32),
        grid=(n_parallel, n_inner),
        in_specs=[
            pl.BlockSpec((c, sub, lane), lambda o, i: (0, o * n_inner + i, 0)),
            pl.BlockSpec((sub, lane), lambda o, i: (o * n_inner + i, 0)),
        ],
        out_specs=pl.BlockSpec((sub, lane), lambda o, i: (o, 0)),
        compiler_params=pltpu.CompilerParams(
            dimension_semantics=("parallel", "arbitrary")),
    )(x_cml, t_ml)

    total = jnp.sum(partials)
    if reduction == "mean":
        return total / jnp.float32(n_valid)
    elif reduction == "sum":
        return total
    # TODO(synk): reduction='none' (per-sample losses) needs a per-sample
    # output spec instead of the accumulated partial-sum block.
    raise NotImplementedError("reduction must be 'mean' or 'sum'")


@functools.partial(
    jax.jit,
    static_argnames=("alpha", "gamma", "lane", "n_parallel", "approx",
                     "reduction"))
def focal_loss(logits, targets, *, alpha=0.25, gamma=2.5, lane=16384,
               n_parallel=None, approx=True, reduction="mean"):
    """Focal loss matching the PyTorch module.

    logits: (N, C) float (f32 or bf16); targets: (N,) int class indices.
    Does ONE dense repack pass (pad + transpose + reshape, fused under jit) to
    the packed class-major layout; producers that can emit that layout should
    call focal_loss_packed directly. Out-of-range targets are NOT checked.
    """
    n, c = logits.shape
    if jnp.dtype(logits.dtype).itemsize > 4:
        logits = logits.astype(jnp.float32)
    if n_parallel is None:
        n_parallel = _default_n_parallel()
    sub = 32 // jnp.dtype(logits.dtype).itemsize

    # Lane sizing: ~2 MiB logits blocks for large N, capped from N so small
    # and mid-size batches don't round up to ~2x padded work.
    lane = max(128, min(_round_up(lane, 128),
                        _round_up(pl.cdiv(n, sub * n_parallel), 128)))
    block = sub * lane
    n_pad = _round_up(n, block * n_parallel)
    s = n_pad // lane

    # Single dense repack: (N, C) row-major -> class-major (C, S, LANE).
    # The result has no sublane/lane padding (S % 8 == 0, LANE % 128 == 0).
    x = jnp.pad(logits, ((0, n_pad - n), (0, 0)))
    x = jnp.transpose(x, (1, 0)).reshape(c, s, lane)
    t = jnp.pad(targets.astype(jnp.int32), (0, n_pad - n)).reshape(s, lane)

    return focal_loss_packed(x, t, n, alpha=alpha, gamma=gamma,
                             n_parallel=n_parallel, approx=approx,
                             reduction=reduction)


def _reference_focal_loss(logits, targets, alpha=0.25, gamma=2.5):
    # Plain-JAX reference mirroring the PyTorch module.
    logp = jax.nn.log_softmax(logits.astype(jnp.float32), axis=-1)
    ce = -jnp.take_along_axis(
        logp, targets[:, None].astype(jnp.int32), axis=-1)[:, 0]
    pt = jnp.exp(-ce)
    eps = 1e-6
    return jnp.mean(alpha * (1.0 - pt + eps) ** gamma * ce)


if __name__ == "__main__":
    key = jax.random.PRNGKey(0)
    k1, k2, k3, k4 = jax.random.split(key, 4)

    # Case 1: IEMOCAP-style small batch, 4 emotion classes, f32, exact recip.
    N1, C1 = 8, 4
    logits1 = jax.random.normal(k1, (N1, C1), dtype=jnp.float32)
    targets1 = jax.random.randint(k2, (N1,), 0, C1, dtype=jnp.int32)
    out1 = jax.block_until_ready(focal_loss(logits1, targets1, approx=False))
    ref1 = _reference_focal_loss(logits1, targets1)
    assert jnp.allclose(out1, ref1, rtol=1e-5, atol=1e-6), (out1, ref1)

    # Case 2: N not a multiple of the block; exercises multi-step accumulation
    # across the (parallel, arbitrary) grid, last-block-only masking, and the
    # approx-reciprocal default.
    N2, C2 = 2500, 4
    logits2 = jax.random.normal(k3, (N2, C2), dtype=jnp.float32)
    targets2 = jax.random.randint(k4, (N2,), 0, C2, dtype=jnp.int32)
    out2 = jax.block_until_ready(
        focal_loss(logits2, targets2, lane=128, n_parallel=2))
    ref2 = _reference_focal_loss(logits2, targets2)
    assert jnp.allclose(out2, ref2, rtol=5e-2, atol=1e-3), (out2, ref2)

    # Case 3: bf16 logits at the kernel boundary (sub=16 packing keeps the
    # bf16 slab dense); math in f32 in-kernel.
    out3 = jax.block_until_ready(focal_loss(logits1.astype(jnp.bfloat16),
                                            targets1))
    assert jnp.allclose(out3, ref1, rtol=0.25, atol=0.05), (out3, ref1)

    print("KERNEL_OK")
</pallas_src>

<mosaic_0001>
module attributes {stable_mosaic.version = 11 : i64} {
  func.func @focal_loss_kernel(%arg0: i32, %arg1: i32, %arg2: memref<4x8x128xf32, #tpu.memory_space<vmem>>, %arg3: memref<8x128xi32, #tpu.memory_space<vmem>>, %arg4: memref<8x128xf32, #tpu.memory_space<vmem>>) attributes {dimension_semantics = [#tpu.dimension_semantics<parallel>, #tpu.dimension_semantics<arbitrary>], iteration_bounds = array<i64: 1, 1>, scalar_prefetch = 0 : i64, scratch_operands = 0 : i64, tpu.core_type = #tpu.core_type<tc>, window_params = [{transform_indices = @transform_0, window_bounds = array<i64: 4, 8, 128>}, {transform_indices = @transform_1, window_bounds = array<i64: 8, 128>}, {transform_indices = @transform_2, window_bounds = array<i64: 8, 128>}]} {
    %c0_i32 = arith.constant 0 : i32
    %0 = arith.cmpi eq, %arg1, %c0_i32 : i32
    %1 = arith.extui %0 : i1 to i32
    %c0_i32_0 = arith.constant 0 : i32
    %2 = arith.cmpi ne, %1, %c0_i32_0 : i32
    scf.if %2 {
      %cst_16 = arith.constant 0.000000e+00 : f32
      %71 = vector.broadcast %cst_16 : f32 to vector<8x128xf32>
      %c0_17 = arith.constant 0 : index
      %c0_18 = arith.constant 0 : index
      %72 = vector.load %arg4[%c0_17, %c0_18] : memref<8x128xf32, #tpu.memory_space<vmem>>, vector<8x128xf32>
      tpu.vector_store %arg4[%c0_17, %c0_18], %71 {strides = array<i32>} : memref<8x128xf32, #tpu.memory_space<vmem>>, vector<8x128xf32>,
    } else {
    }
    %c0 = arith.constant 0 : index
    %c0_1 = arith.constant 0 : index
    %c0_2 = arith.constant 0 : index
    %3 = vector.load %arg2[%c0, %c0_1, %c0_2] : memref<4x8x128xf32, #tpu.memory_space<vmem>>, vector<4x8x128xf32>
    %c0_3 = arith.constant 0 : index
    %c0_4 = arith.constant 0 : index
    %4 = vector.load %arg3[%c0_3, %c0_4] : memref<8x128xi32, #tpu.memory_space<vmem>>, vector<8x128xi32>
    %5 = vector.extract_strided_slice %3 {offsets = [0, 0, 0], sizes = [1, 8, 128], strides = [1, 1, 1]} : vector<4x8x128xf32> to vector<1x8x128xf32>
    %6 = vector.shape_cast %5 : vector<1x8x128xf32> to vector<8x128xf32>
    %7 = vector.extract_strided_slice %3 {offsets = [1, 0, 0], sizes = [1, 8, 128], strides = [1, 1, 1]} : vector<4x8x128xf32> to vector<1x8x128xf32>
    %8 = vector.shape_cast %7 : vector<1x8x128xf32> to vector<8x128xf32>
    %9 = vector.extract_strided_slice %3 {offsets = [2, 0, 0], sizes = [1, 8, 128], strides = [1, 1, 1]} : vector<4x8x128xf32> to vector<1x8x128xf32>
    %10 = vector.shape_cast %9 : vector<1x8x128xf32> to vector<8x128xf32>
    %11 = vector.extract_strided_slice %3 {offsets = [3, 0, 0], sizes = [1, 8, 128], strides = [1, 1, 1]} : vector<4x8x128xf32> to vector<1x8x128xf32>
    %12 = vector.shape_cast %11 : vector<1x8x128xf32> to vector<8x128xf32>
    %13 = arith.maximumf %6, %8 : vector<8x128xf32>
    %14 = arith.maximumf %13, %10 : vector<8x128xf32>
    %15 = arith.maximumf %14, %12 : vector<8x128xf32>
    %cst = arith.constant 0.000000e+00 : f32
    %16 = vector.broadcast %cst : f32 to vector<8x128xf32>
    %cst_5 = arith.constant 0.000000e+00 : f32
    %17 = vector.broadcast %cst_5 : f32 to vector<8x128xf32>
    %18 = arith.subf %6, %15 : vector<8x128xf32>
    %19 = math.exp %18 : vector<8x128xf32>
    %c0_i32_6 = arith.constant 0 : i32
    %20 = vector.broadcast %c0_i32_6 : i32 to vector<8x128xi32>
    %21 = arith.cmpi eq, %4, %20 : vector<8x128xi32>
    %22 = arith.select %21, %6, %16 : vector<8x128xi1>, vector<8x128xf32>
    %23 = arith.select %21, %19, %17 : vector<8x128xi1>, vector<8x128xf32>
    %24 = arith.subf %8, %15 : vector<8x128xf32>
    %25 = math.exp %24 : vector<8x128xf32>
    %26 = arith.addf %19, %25 : vector<8x128xf32>
    %c1_i32 = arith.constant 1 : i32
    %27 = vector.broadcast %c1_i32 : i32 to vector<8x128xi32>
    %28 = arith.cmpi eq, %4, %27 : vector<8x128xi32>
    %29 = arith.select %28, %8, %22 : vector<8x128xi1>, vector<8x128xf32>
    %30 = arith.select %28, %25, %23 : vector<8x128xi1>, vector<8x128xf32>
    %31 = arith.subf %10, %15 : vector<8x128xf32>
    %32 = math.exp %31 : vector<8x128xf32>
    %33 = arith.addf %26, %32 : vector<8x128xf32>
    %c2_i32 = arith.constant 2 : i32
    %34 = vector.broadcast %c2_i32 : i32 to vector<8x128xi32>
    %35 = arith.cmpi eq, %4, %34 : vector<8x128xi32>
    %36 = arith.select %35, %10, %29 : vector<8x128xi1>, vector<8x128xf32>
    %37 = arith.select %35, %32, %30 : vector<8x128xi1>, vector<8x128xf32>
    %38 = arith.subf %12, %15 : vector<8x128xf32>
    %39 = math.exp %38 : vector<8x128xf32>
    %40 = arith.addf %33, %39 : vector<8x128xf32>
    %c3_i32 = arith.constant 3 : i32
    %41 = vector.broadcast %c3_i32 : i32 to vector<8x128xi32>
    %42 = arith.cmpi eq, %4, %41 : vector<8x128xi32>
    %43 = arith.select %42, %12, %36 : vector<8x128xi1>, vector<8x128xf32>
    %44 = arith.select %42, %39, %37 : vector<8x128xi1>, vector<8x128xf32>
    %45 = math.log %40 : vector<8x128xf32>
    %46 = arith.addf %15, %45 : vector<8x128xf32>
    %47 = arith.subf %46, %43 : vector<8x128xf32>
    %48 = tpu.reciprocal %40 : vector<8x128xf32> -> vector<8x128xf32>
    %49 = arith.mulf %44, %48 : vector<8x128xf32>
    %cst_7 = arith.constant 1.00000095 : f32
    %50 = vector.broadcast %cst_7 : f32 to vector<8x128xf32>
    %51 = arith.subf %50, %49 : vector<8x128xf32>
    %cst_8 = arith.constant 9.99999997E-7 : f32
    %52 = vector.broadcast %cst_8 : f32 to vector<8x128xf32>
    %53 = arith.maximumf %51, %52 : vector<8x128xf32>
    %54 = arith.mulf %53, %53 : vector<8x128xf32>
    %55 = math.sqrt %53 : vector<8x128xf32>
    %56 = arith.mulf %54, %55 : vector<8x128xf32>
    %cst_9 = arith.constant 2.500000e-01 : f32
    %57 = vector.broadcast %cst_9 : f32 to vector<8x128xf32>
    %58 = arith.mulf %57, %56 : vector<8x128xf32>
    %59 = arith.mulf %58, %47 : vector<8x128xf32>
    %c1_i32_10 = arith.constant 1 : i32
    %60 = arith.muli %arg0, %c1_i32_10 : i32
    %61 = arith.addi %60, %arg1 : i32
    %c1024_i32 = arith.constant 1024 : i32
    %62 = arith.muli %61, %c1024_i32 : i32
    %c1024_i32_11 = arith.constant 1024 : i32
    %63 = arith.addi %62, %c1024_i32_11 : i32
    %c8_i32 = arith.constant 8 : i32
    %64 = arith.cmpi sle, %63, %c8_i32 : i32
    %65 = arith.extui %64 : i1 to i32
    %c0_i32_12 = arith.constant 0 : i32
    %66 = arith.cmpi ne, %65, %c0_i32_12 : i32
    scf.if %66 {
      %c0_16 = arith.constant 0 : index
      %c0_17 = arith.constant 0 : index
      %71 = vector.load %arg4[%c0_16, %c0_17] : memref<8x128xf32, #tpu.memory_space<vmem>>, vector<8x128xf32>
      %72 = arith.addf %71, %59 : vector<8x128xf32>
      %c0_18 = arith.constant 0 : index
      %c0_19 = arith.constant 0 : index
      %73 = vector.load %arg4[%c0_18, %c0_19] : memref<8x128xf32, #tpu.memory_space<vmem>>, vector<8x128xf32>
      tpu.vector_store %arg4[%c0_18, %c0_19], %72 {strides = array<i32>} : memref<8x128xf32, #tpu.memory_space<vmem>>, vector<8x128xf32>,
    } else {
    }
    %c1024_i32_13 = arith.constant 1024 : i32
    %67 = arith.addi %62, %c1024_i32_13 : i32
    %c8_i32_14 = arith.constant 8 : i32
    %68 = arith.cmpi sgt, %67, %c8_i32_14 : i32
    %69 = arith.extui %68 : i1 to i32
    %c0_i32_15 = arith.constant 0 : i32
    %70 = arith.cmpi ne, %69, %c0_i32_15 : i32
    scf.if %70 {
      %71 = tpu.iota {dimensions = array<i32: 0>} : vector<8x128xi32>
      %72 = tpu.iota {dimensions = array<i32: 1>} : vector<8x128xi32>
      %c128_i32 = arith.constant 128 : i32
      %73 = vector.broadcast %c128_i32 : i32 to vector<8x128xi32>
      %74 = arith.muli %71, %73 : vector<8x128xi32>
      %75 = vector.broadcast %62 : i32 to vector<8x128xi32>
      %76 = arith.addi %75, %74 : vector<8x128xi32>
      %77 = arith.addi %76, %72 : vector<8x128xi32>
      %c0_16 = arith.constant 0 : index
      %c0_17 = arith.constant 0 : index
      %78 = vector.load %arg4[%c0_16, %c0_17] : memref<8x128xf32, #tpu.memory_space<vmem>>, vector<8x128xf32>
      %c8_i32_18 = arith.constant 8 : i32
      %79 = vector.broadcast %c8_i32_18 : i32 to vector<8x128xi32>
      %80 = arith.cmpi slt, %77, %79 : vector<8x128xi32>
      %cst_19 = arith.constant 0.000000e+00 : f32
      %81 = vector.broadcast %cst_19 : f32 to vector<8x128xf32>
      %82 = arith.select %80, %59, %81 : vector<8x128xi1>, vector<8x128xf32>
      %83 = arith.addf %78, %82 : vector<8x128xf32>
      %c0_20 = arith.constant 0 : index
      %c0_21 = arith.constant 0 : index
      %84 = vector.load %arg4[%c0_20, %c0_21] : memref<8x128xf32, #tpu.memory_space<vmem>>, vector<8x128xf32>
      tpu.vector_store %arg4[%c0_20, %c0_21], %83 {strides = array<i32>} : memref<8x128xf32, #tpu.memory_space<vmem>>, vector<8x128xf32>,
    } else {
    }
    return
  }
  func.func @transform_0(%arg0: i32, %arg1: i32) -> (i32, i32, i32) {
    %c1_i32 = arith.constant 1 : i32
    %0 = arith.muli %arg0, %c1_i32 : i32
    %1 = arith.addi %0, %arg1 : i32
    %c0_i32 = arith.constant 0 : i32
    %c0_i32_0 = arith.constant 0 : i32
    %c0_i32_1 = arith.constant 0 : i32
    return %c0_i32, %1, %c0_i32_0 : i32, i32, i32
  }
  func.func @transform_1(%arg0: i32, %arg1: i32) -> (i32, i32) {
    %c1_i32 = arith.constant 1 : i32
    %0 = arith.muli %arg0, %c1_i32 : i32
    %1 = arith.addi %0, %arg1 : i32
    %c0_i32 = arith.constant 0 : i32
    %c0_i32_0 = arith.constant 0 : i32
    return %1, %c0_i32 : i32, i32
  }
  func.func @transform_2(%arg0: i32, %arg1: i32) -> (i32, i32) {
    %c0_i32 = arith.constant 0 : i32
    %c0_i32_0 = arith.constant 0 : i32
    return %arg0, %c0_i32 : i32, i32
  }
}

</mosaic_0001>

<llo_original>
// kernel: focal_loss.1
$region0: #{focal_loss.1}
  #allocation0 [shape = 'u32[]', space=smem, size = 0x4, offset = 0x4, fixed_abs, tag = 'smem constant byte address 0x4 - core index']
  #allocation1 [shape = 'u32[144,128]{1,0:T(1,128)}', space=vmem, size = 0x12000, scoped, tag = 'internal scratch']
  %s0 = inlined_call_operand.vmem [shape: f32[4,8,128], index: 0, kind: input, shape index: {}]
  %s1 = inlined_call_operand.vmem [shape: s32[8,128], index: 1, kind: input, shape index: {}]
  %s2 = inlined_call_operand.vmem [shape: f32[8,128], index: 2, kind: output, shape index: {}]
  %s3 = sld [smem:[#allocation0]]
  $region30: #{focal_loss.1} parent=0
    _
  %s5 = ssub.s32 1, %s3
  %s6 = scalar_select 0, %s5, %s3
  // Predicated region
  $region2: #{focal_loss.1} parent=0 // pred_check
    _
  $region3: #{focal_loss.1} parent=0 // pred_check_branch
    %8 = sbr.rel (0) target = $region5
  $region4: #{focal_loss.1} parent=0 // pred_region
    %s9 = sadd.s32 0, 0
    %p10 = scmp.lt.s32.totalorder %s9, 0
    %s11 = scalar_select %p10, %s9, 0
    %s12 = smul.addr %s11, 8
    %s13 = scalar_lea.vmem %s0, %s12
    %s14 = sadd.s32 0, 0
  $region5: #{focal_loss.1} parent=0 // pred_fallthru
    _
  // Predicated region
  $region6: #{focal_loss.1} parent=0 // pred_check
    _
  $region7: #{focal_loss.1} parent=0 // pred_check_branch
    %16 = sbr.rel (0) target = $region9
  $region8: #{focal_loss.1} parent=0 // pred_region
    %s17 = sadd.s32 0, 0
    %p18 = scmp.lt.s32.totalorder %s17, 0
    %s19 = scalar_select %p18, %s17, 0
    %s20 = smul.addr %s19, 8
    %s21 = scalar_lea.vmem %s1, %s20
    %s22 = sadd.s32 0, 0
  $region9: #{focal_loss.1} parent=0 // pred_fallthru
    _
  %s23 = sadd.s32 0, 0
  %p24 = scmp.lt.s32.totalorder %s23, 0
  %s25 = scalar_select %p24, %s23, 0
  %s26 = smul.addr %s25, 8
  %s27 = scalar_lea.vmem %s0, %s26
  %s28 = sadd.s32 0, 0
  %p29 = scmp.lt.s32.totalorder %s28, 0
  %s30 = scalar_select %p29, %s28, 0
  %s31 = smul.addr %s30, 8
  %s32 = scalar_lea.vmem %s1, %s31
  %s33 = sadd.s32 0, 0
  %p34 = scmp.lt.s32.totalorder %s33, 0
  %s35 = scalar_select %p34, %s33, 0
  %s36 = smul.addr %s35, 8
  %s37 = scalar_lea.vmem %s0, %s36
  %s38 = sadd.s32 0, 0
  %s39 = sadd.s32 0, 0
  %p40 = scmp.lt.s32.totalorder %s39, 0
  %s41 = scalar_select %p40, %s39, 0
  %s42 = smul.addr %s41, 8
  %s43 = scalar_lea.vmem %s1, %s42
  %s44 = sadd.s32 0, 0
  %p45 = scmp.eq.s32.totalorder 0, 0
  // Predicated region
  $region10: #{focal_loss.1} parent=0 // pred_check
    %p46 = pneg %p45
  $region11: #{focal_loss.1} parent=0 // pred_check_branch
    %48 = sbr.rel (%p46) target = $region13
  $region12: #{focal_loss.1} parent=0 // pred_region
    %49 = vst [vmem:[%s2] sm:$0xff] 0.0
  $region13: #{focal_loss.1} parent=0 // pred_fallthru
    _
  %v50 = vld [vmem:[%s37] sm:$0xff]
  %v51 = vld [vmem:[%s37 + $0x8] sm:$0xff]
  %v52 = vld [vmem:[%s37 + $0x10] sm:$0xff]
  %v53 = vld [vmem:[%s37 + $0x18] sm:$0xff]
  %v54 = vld [vmem:[%s43] sm:$0xff]
  %v55 = vmax.f32 %v50, %v51
  %v56 = vmax.f32 %v55, %v52
  %v57 = vmax.f32 %v56, %v53
  %v58 = vsub.f32 %v50, %v57
  %v59 = vmul.f32 %v58, 1.442695
  %v60 = vpow.pop %v59
  %vm61 = vcmp.eq.s32.totalorder %v54, 0
  %v62 = vsel %vm61, %v50, 0.0
  %v63 = vsel %vm61, %v60, 0.0
  %v64 = vsub.f32 %v51, %v57
  %v65 = vmul.f32 %v64, 1.442695
  %v66 = vpow.pop %v65
  %v67 = vadd.f32 %v60, %v66
  %vm68 = vcmp.eq.s32.totalorder %v54, 1
  %v69 = vsel %vm68, %v51, %v62
  %v70 = vsel %vm68, %v66, %v63
  %v71 = vsub.f32 %v52, %v57
  %v72 = vmul.f32 %v71, 1.442695
  %v73 = vpow.pop %v72
  %v74 = vadd.f32 %v67, %v73
  %vm75 = vcmp.eq.s32.totalorder %v54, 2
  %v76 = vsel %vm75, %v52, %v69
  %v77 = vsel %vm75, %v73, %v70
  %v78 = vsub.f32 %v53, %v57
  %v79 = vmul.f32 %v78, 1.442695
  %v80 = vpow.pop %v79
  %v81 = vadd.f32 %v74, %v80
  %vm82 = vcmp.eq.s32.totalorder %v54, 3
  %v83 = vsel %vm82, %v53, %v76
  %v84 = vsel %vm82, %v80, %v77
  %v85 = vlog2.pop %v81
  %v86 = vmul.f32 %v85, 0.6931472
  %v87 = vadd.f32 %v57, %v86
  %v88 = vsub.f32 %v87, %v83
  %v89 = vrcp.pop %v81
  %v90 = vmul.f32 %v84, %v89
  %v91 = vsub.f32 1.000001, %v90
  %v92 = vmax.f32 %v91, 1e-06
  %v93 = vmul.f32 %v92, %v92
  %v94 = vrsqrt.pop %v92
  %v95 = vmul.f32 %v92, %v94
  %vm96 = vcmp.eq.f32.partialorder %v92, inf
  %v97 = vsel %vm96, %v92, %v95
  %vm98 = vcmp.eq.f32.partialorder %v92, 0.0
  %v99 = vand.u32 %v92, 2147483648
  %v100 = vsel %vm98, %v99, %v97
  %v101 = vmul.f32 %v93, %v100
  %v102 = vmul.f32 %v101, 0.25
  %v103 = vmul.f32 %v102, %v88
  %s104 = sadd.s32 0, 0
  %s105 = smul.u32 %s104, 1024
  %s106 = sadd.s32 %s105, 1024
  %p107 = scmp.le.s32.totalorder %s106, 8
  // Predicated region
  $region14: #{focal_loss.1} parent=0 // pred_check
    %p108 = pneg %p107
  $region15: #{focal_loss.1} parent=0 // pred_check_branch
    %110 = sbr.rel (%p108) target = $region17
  $region16: #{focal_loss.1} parent=0 // pred_region
    %v111 = vld [vmem:[%s2] sm:$0xff]
    %v112 = vadd.f32 %v111, %v103
    %113 = vst [vmem:[%s2] sm:$0xff] %v112
  $region17: #{focal_loss.1} parent=0 // pred_fallthru
    _
  %p114 = scmp.gt.s32.totalorder %s106, 8
  // Predicated region
  $region18: #{focal_loss.1} parent=0 // pred_check
    %p115 = pneg %p114
  $region19: #{focal_loss.1} parent=0 // pred_check_branch
    %117 = sbr.rel (%p115) target = $region21
  $region20: #{focal_loss.1} parent=0 // pred_region
    %v118 = vlaneseq
    %v119 = vshrl.u32 %v118, 7
    %v120 = vlaneseq
    %v121 = vand.u32 %v120, 127
    %v122 = vmul.u32 %v119, 128
    %v123 = vstv %s105
    %v124 = vadd.s32 %v123, %v122
    %v125 = vadd.s32 %v124, %v121
    %v126 = vld [vmem:[%s2] sm:$0xff]
    %vm127 = vcmp.lt.s32.totalorder %v125, 8
    %v128 = vsel %vm127, %v103, 0.0
    %v129 = vadd.f32 %v126, %v128
    %130 = vst [vmem:[%s2] sm:$0xff] %v129
  $region21: #{focal_loss.1} parent=0 // pred_fallthru
    _
  // Predicated region
  $region22: #{focal_loss.1} parent=0 // pred_check
    _
  $region23: #{focal_loss.1} parent=0 // pred_check_branch
    %132 = sbr.rel (0) target = $region25
  $region24: #{focal_loss.1} parent=0 // pred_region
    _
  $region25: #{focal_loss.1} parent=0 // pred_fallthru
    _
  // Predicated region
  $region26: #{focal_loss.1} parent=0 // pred_check
    _
  $region27: #{focal_loss.1} parent=0 // pred_check_branch
    %134 = sbr.rel (0) target = $region29
  $region28: #{focal_loss.1} parent=0 // pred_region
    _
  $region29: #{focal_loss.1} parent=0 // pred_fallthru
    _

</llo_original>
